<compile_context>
chip_gen: v5e
topology: v5e:2x2
jax: 0.10.0
libtpu: 0.0.40
codegen_flags: <defaults>
</compile_context>

<pallas_src>
import jax
import jax.numpy as jnp
from jax.experimental import pallas as pl
from jax.experimental.pallas import tpu as pltpu

_LEAKY_SLOPE = 0.01  # PyTorch nn.LeakyReLU default negative_slope


# ---------------------------------------------------------------------------
# Kernels
# ---------------------------------------------------------------------------
def _eval_ann_kernel_bd(x_ref, w1_ref, b1_ref, w2_ref, b2_ref, o_ref):
    """X tile in PyTorch layout.

    x_ref : [tb, D]  (f32 or bf16)  current batch tile of X
    w1_ref: [H, D]   (same dtype as X)
    b1_ref: [H, 1]   f32
    w2_ref: [H, 1]   f32  (Linear-2 weight as a column)
    b2_ref: [1]      f32  (SMEM scalar)
    o_ref : [1, tb]  f32  lane-dense output tile
    """
    # hT[h, b] = sum_d W1[h, d] * X[b, d]  (f32 MXU accumulate). W1 is the tiny
    # operand; any Mosaic relayout should land on W1 (15xD), not the streamed
    # X tile.  TODO(synk): confirm via MLIR dump that the [tb, D] tile is not
    # transposed per step on v7x; if it is, feed X^T (see eval_ann_forward_xt).
    h = jax.lax.dot_general(
        w1_ref[...], x_ref[...],
        dimension_numbers=(((1,), (1,)), ((), ())),
        preferred_element_type=jnp.float32,
    )                                              # [H, tb] f32
    h = h + b1_ref[...]                            # [H, 1] broadcast over lanes
    h = jnp.where(h > 0, h, _LEAKY_SLOPE * h)      # LeakyReLU (VPU)
    # Layer 2: VPU mul + XLU sublane reduce over the 15 hidden rows.  Free
    # filler under DMA slack on v5e/v6e; on v7x move to a second tiny MXU dot
    # if the bundle dump shows the XLU reduce binding.
    y = jnp.sum(h * w2_ref[...], axis=0, keepdims=True)     # [1, tb]
    o_ref[...] = (y + b2_ref[0]).astype(o_ref.dtype)


def _eval_ann_kernel_xt(xt_ref, w1_ref, b1_ref, w2_ref, b2_ref, o_ref):
    """X supplied pre-transposed: xt_ref is a lane-dense [D, tb] tile."""
    h = jnp.dot(w1_ref[...], xt_ref[...],
                preferred_element_type=jnp.float32)          # [H, tb] f32
    h = h + b1_ref[...]
    h = jnp.where(h > 0, h, _LEAKY_SLOPE * h)
    y = jnp.sum(h * w2_ref[...], axis=0, keepdims=True)     # [1, tb]
    o_ref[...] = (y + b2_ref[0]).astype(o_ref.dtype)


# ---------------------------------------------------------------------------
# Tiling / VMEM planning (generation gated)
# ---------------------------------------------------------------------------
def _round_up(x, m):
    return (x + m - 1) // m * m


def _vmem_capacity_bytes():
    try:
        info = pltpu.get_tpu_info()
        cap = getattr(info, "vmem_capacity_bytes", None)
        if cap:
            return int(cap)
    except Exception:
        pass
    return 64 * 1024 * 1024  # conservative fallback: v7x physical VMEM


def _tile_plan(B, row_bytes_padded, requested_block_b, default_block_b=None):
    """Pick (batch-tile rows, vmem_limit_bytes).

    row_bytes_padded: VMEM bytes one batch row of X occupies inside its
    (8,128)-tiled pipeline buffer (NOT its raw HBM size).
    """
    cap = _vmem_capacity_bytes()
    if cap >= 100 * 1024 * 1024:
        # v5e / v6e: 128 MiB physical VMEM.
        gen_block_b = 32 * 1024
        vmem_limit = 96 * 1024 * 1024
    else:
        # v7x: 64 MiB physical VMEM — leave headroom for Mosaic scratch.
        gen_block_b = 24 * 1024
        vmem_limit = 48 * 1024 * 1024

    block_b = requested_block_b
    if block_b is None:
        block_b = default_block_b if default_block_b is not None else gen_block_b
        block_b = min(block_b, gen_block_b) if default_block_b is None else block_b

    # Per batch row of VMEM: double-buffered X + [H->16, tb] f32 hidden temp
    # + two padded [1->8, tb] f32 output buffers.
    per_row = 2 * row_bytes_padded + 16 * 4 + 2 * 8 * 4
    budget = int(vmem_limit * 0.7)
    max_rows = max(128, (budget // per_row) // 128 * 128)

    block_b = min(block_b, max_rows, _round_up(B, 128))
    block_b = max(128, _round_up(block_b, 128))
    return block_b, vmem_limit


def _prep_params(w1, b1, w2, b2, x_dtype):
    H, D = w1.shape
    assert b1.shape == (H,) and w2.shape == (1, H) and b2.shape == (1,)
    w1c = w1.astype(x_dtype)                       # tiny; match streamed X dtype
    b1c = b1.astype(jnp.float32).reshape(H, 1)     # f32 epilogue
    w2c = w2.astype(jnp.float32).T                 # [H, 1] column
    b2c = b2.astype(jnp.float32).reshape(1)        # SMEM scalar
    return w1c, b1c, w2c, b2c, H, D


# ---------------------------------------------------------------------------
# Forward wrappers
# ---------------------------------------------------------------------------
def eval_ann_forward(x, w1, b1, w2, b2, *, block_b=None):
    """EvalANN forward.

    x : [B, D] (f32 or bf16 — streamed in the producer's dtype, no wrapper cast)
    w1: [15, D], b1: [15], w2: [1, 15], b2: [1]  (PyTorch nn.Linear layouts)
    Returns soc_hat: [B] float32.
    """
    B, D = x.shape
    w1c, b1c, w2c, b2c, H, _ = _prep_params(w1, b1, w2, b2, x.dtype)

    # [tb, D] block: lane dim pads to 128 in VMEM -> tb * round_up(D,128) * itemsize.
    row_bytes_padded = _round_up(D, 128) * jnp.dtype(x.dtype).itemsize
    tb, vmem_limit = _tile_plan(B, row_bytes_padded, block_b)
    num_tiles = pl.cdiv(B, tb)

    cost = pl.CostEstimate(
        flops=2 * B * H * (D + 1),
        transcendentals=0,
        bytes_accessed=B * (D * jnp.dtype(x.dtype).itemsize + 4)
        + (H * D + 2 * H + 1) * 4,
    )

    out = pl.pallas_call(
        _eval_ann_kernel_bd,
        out_shape=jax.ShapeDtypeStruct((1, B), jnp.float32),
        grid=(num_tiles,),
        in_specs=[
            pl.BlockSpec((tb, D), lambda i: (i, 0)),             # X: streamed
            pl.BlockSpec((H, D), lambda i: (0, 0)),              # W1: resident
            pl.BlockSpec((H, 1), lambda i: (0, 0)),              # b1: resident
            pl.BlockSpec((H, 1), lambda i: (0, 0)),              # w2 col: resident
            pl.BlockSpec(memory_space=pltpu.MemorySpace.SMEM),   # b2 scalar
        ],
        out_specs=pl.BlockSpec((1, tb), lambda i: (0, i)),       # lane-dense out
        compiler_params=pltpu.CompilerParams(
            dimension_semantics=("parallel",),   # shard batch grid across TCs (v7x)
            vmem_limit_bytes=vmem_limit,
        ),
        cost_estimate=cost,
    )(x, w1c, b1c, w2c, b2c)

    return out.reshape(-1)   # soc_hat.reshape(-1); out already has exactly B cols


def eval_ann_forward_xt(xT, w1, b1, w2, b2, *, block_b=None):
    """Same forward, but X supplied pre-transposed by the producer: xT is [D, B].

    Preferred layout: [D, tb] X buffers are lane-dense (no 16x lane padding),
    DMA descriptors are full width, and the MXU consumes W1[15,D] @ X^T[D,tb]
    in its natural orientation.  Do NOT call this by transposing X in the
    wrapper — that would add a full extra HBM pass.
    """
    D, B = xT.shape
    w1c, b1c, w2c, b2c, H, Dw = _prep_params(w1, b1, w2, b2, xT.dtype)
    assert Dw == D

    row_bytes_padded = _round_up(D, 8) * jnp.dtype(xT.dtype).itemsize
    tb, vmem_limit = _tile_plan(B, row_bytes_padded, block_b,
                                default_block_b=128 * 1024)
    num_tiles = pl.cdiv(B, tb)

    cost = pl.CostEstimate(
        flops=2 * B * H * (D + 1),
        transcendentals=0,
        bytes_accessed=B * (D * jnp.dtype(xT.dtype).itemsize + 4)
        + (H * D + 2 * H + 1) * 4,
    )

    out = pl.pallas_call(
        _eval_ann_kernel_xt,
        out_shape=jax.ShapeDtypeStruct((1, B), jnp.float32),
        grid=(num_tiles,),
        in_specs=[
            pl.BlockSpec((D, tb), lambda i: (0, i)),             # X^T: streamed, lane-dense
            pl.BlockSpec((H, D), lambda i: (0, 0)),
            pl.BlockSpec((H, 1), lambda i: (0, 0)),
            pl.BlockSpec((H, 1), lambda i: (0, 0)),
            pl.BlockSpec(memory_space=pltpu.MemorySpace.SMEM),
        ],
        out_specs=pl.BlockSpec((1, tb), lambda i: (0, i)),
        compiler_params=pltpu.CompilerParams(
            dimension_semantics=("parallel",),
            vmem_limit_bytes=vmem_limit,
        ),
        cost_estimate=cost,
    )(xT, w1c, b1c, w2c, b2c)

    return out.reshape(-1)


# ---------------------------------------------------------------------------
# Init + demo
# ---------------------------------------------------------------------------
def init_params(key, input_size, hidden=15, out=1):
    """PyTorch-style fan-in uniform init, PyTorch weight layouts."""
    k1, k2, k3, k4 = jax.random.split(key, 4)
    bound1 = 1.0 / jnp.sqrt(input_size)
    bound2 = 1.0 / jnp.sqrt(hidden)
    w1 = jax.random.uniform(k1, (hidden, input_size), jnp.float32, -bound1, bound1)
    b1 = jax.random.uniform(k2, (hidden,), jnp.float32, -bound1, bound1)
    w2 = jax.random.uniform(k3, (out, hidden), jnp.float32, -bound2, bound2)
    b2 = jax.random.uniform(k4, (out,), jnp.float32, -bound2, bound2)
    return w1, b1, w2, b2


if __name__ == "__main__":
    key = jax.random.PRNGKey(0)
    kx, kp = jax.random.split(key)

    batch = 500          # exercises multi-tile grid + ragged (unpadded) tail
    input_size = 8

    x = jax.random.normal(kx, (batch, input_size), jnp.float32)
    w1, b1, w2, b2 = init_params(kp, input_size)

    # Pure-JAX reference (PyTorch layouts, f32).
    h_ref = x @ w1.T + b1
    h_ref = jnp.where(h_ref > 0, h_ref, 0.01 * h_ref)
    ref = (h_ref @ w2.T + b2).reshape(-1)

    # f32 path (small block override to exercise a multi-step grid at demo scale).
    soc_hat = eval_ann_forward(x, w1, b1, w2, b2, block_b=256)
    jax.block_until_ready(soc_hat)
    assert soc_hat.shape == (batch,)
    assert jnp.allclose(soc_hat, ref, atol=1e-3, rtol=1e-3), \
        float(jnp.max(jnp.abs(soc_hat - ref)))

    # bf16-from-producer path (no wrapper cast inside eval_ann_forward; the
    # cast here stands in for a producer that already emits bf16).
    x_bf16 = x.astype(jnp.bfloat16)
    soc_bf16 = eval_ann_forward(x_bf16, w1, b1, w2, b2, block_b=256)
    jax.block_until_ready(soc_bf16)
    assert soc_bf16.shape == (batch,)
    assert jnp.allclose(soc_bf16, ref, atol=5e-2, rtol=5e-2), \
        float(jnp.max(jnp.abs(soc_bf16 - ref)))

    # X^T (lane-dense) path, for producers that can supply [D, B] directly.
    xT = jnp.asarray(x.T)   # demo-only setup; a real producer would emit [D, B]
    soc_xt = eval_ann_forward_xt(xT, w1, b1, w2, b2, block_b=128)
    jax.block_until_ready(soc_xt)
    assert soc_xt.shape == (batch,)
    assert jnp.allclose(soc_xt, ref, atol=1e-3, rtol=1e-3), \
        float(jnp.max(jnp.abs(soc_xt - ref)))

    print("KERNEL_OK")
</pallas_src>

<mosaic_0001>
module attributes {stable_mosaic.version = 11 : i64} {
  func.func @_eval_ann_kernel_bd(%arg0: i32, %arg1: memref<256x8xf32, #tpu.memory_space<vmem>>, %arg2: memref<15x8xf32, #tpu.memory_space<vmem>>, %arg3: memref<15x1xf32, #tpu.memory_space<vmem>>, %arg4: memref<15x1xf32, #tpu.memory_space<vmem>>, %arg5: memref<1xf32, #tpu.memory_space<smem>>, %arg6: memref<1x256xf32, #tpu.memory_space<vmem>>) attributes {dimension_semantics = [#tpu.dimension_semantics<parallel>], iteration_bounds = array<i64: 2>, scalar_prefetch = 0 : i64, scratch_operands = 0 : i64, tpu.core_type = #tpu.core_type<tc>, window_params = [{transform_indices = @transform_0, window_bounds = array<i64: 256, 8>}, {pipeline_mode = #tpu.pipeline_mode<synchronous>, transform_indices = @transform_1, window_bounds = array<i64: 15, 8>}, {pipeline_mode = #tpu.pipeline_mode<synchronous>, transform_indices = @transform_2, window_bounds = array<i64: 15, 1>}, {pipeline_mode = #tpu.pipeline_mode<synchronous>, transform_indices = @transform_3, window_bounds = array<i64: 15, 1>}, {transform_indices = @transform_4, window_bounds = array<i64: 1>}, {transform_indices = @transform_5, window_bounds = array<i64: 1, 256>}]} {
    %c0 = arith.constant 0 : index
    %c0_0 = arith.constant 0 : index
    %0 = vector.load %arg2[%c0, %c0_0] : memref<15x8xf32, #tpu.memory_space<vmem>>, vector<15x8xf32>
    %c0_1 = arith.constant 0 : index
    %c0_2 = arith.constant 0 : index
    %1 = vector.load %arg1[%c0_1, %c0_2] : memref<256x8xf32, #tpu.memory_space<vmem>>, vector<256x8xf32>
    %cst = arith.constant dense<0.000000e+00> : vector<15x256xf32>
    %2 = tpu.matmul %0, %1, %cst {dimension_numbers = #tpu.dot_dimension_numbers<[1], [1], [0], [0], [0, 0, 1, 0], [], []>} : vector<15x8xf32>, vector<256x8xf32>, vector<15x256xf32> -> vector<15x256xf32>
    %c0_3 = arith.constant 0 : index
    %c0_4 = arith.constant 0 : index
    %3 = vector.load %arg3[%c0_3, %c0_4] : memref<15x1xf32, #tpu.memory_space<vmem>>, vector<15x1xf32>
    %4 = vector.broadcast %3 : vector<15x1xf32> to vector<15x256xf32>
    %5 = arith.addf %2, %4 : vector<15x256xf32>
    %cst_5 = arith.constant 0.000000e+00 : f32
    %6 = vector.broadcast %cst_5 : f32 to vector<15x256xf32>
    %7 = arith.cmpf ogt, %5, %6 : vector<15x256xf32>
    %cst_6 = arith.constant 0.00999999977 : f32
    %8 = vector.broadcast %cst_6 : f32 to vector<15x256xf32>
    %9 = arith.mulf %8, %5 : vector<15x256xf32>
    %10 = arith.select %7, %5, %9 : vector<15x256xi1>, vector<15x256xf32>
    %c0_7 = arith.constant 0 : index
    %c0_8 = arith.constant 0 : index
    %11 = vector.load %arg4[%c0_7, %c0_8] : memref<15x1xf32, #tpu.memory_space<vmem>>, vector<15x1xf32>
    %12 = vector.broadcast %11 : vector<15x1xf32> to vector<15x256xf32>
    %13 = arith.mulf %10, %12 : vector<15x256xf32>
    %cst_9 = arith.constant dense<0.000000e+00> : vector<256xf32>
    %14 = vector.multi_reduction <add>, %13, %cst_9 [0] : vector<15x256xf32> to vector<256xf32>
    %15 = vector.shape_cast %14 : vector<256xf32> to vector<1x256xf32>
    %c0_10 = arith.constant 0 : index
    %16 = memref.load %arg5[%c0_10] : memref<1xf32, #tpu.memory_space<smem>>
    %17 = vector.broadcast %16 : f32 to vector<1x256xf32>
    %18 = arith.addf %15, %17 : vector<1x256xf32>
    %c0_11 = arith.constant 0 : index
    %c0_12 = arith.constant 0 : index
    %19 = vector.load %arg6[%c0_11, %c0_12] : memref<1x256xf32, #tpu.memory_space<vmem>>, vector<1x256xf32>
    tpu.vector_store %arg6[%c0_11, %c0_12], %18 {strides = array<i32>} : memref<1x256xf32, #tpu.memory_space<vmem>>, vector<1x256xf32>,
    return
  }
  func.func @transform_0(%arg0: i32) -> (i32, i32) {
    %c0_i32 = arith.constant 0 : i32
    %c0_i32_0 = arith.constant 0 : i32
    return %arg0, %c0_i32 : i32, i32
  }
  func.func @transform_1(%arg0: i32) -> (i32, i32) {
    %c0_i32 = arith.constant 0 : i32
    %c0_i32_0 = arith.constant 0 : i32
    %c0_i32_1 = arith.constant 0 : i32
    return %c0_i32, %c0_i32_0 : i32, i32
  }
  func.func @transform_2(%arg0: i32) -> (i32, i32) {
    %c0_i32 = arith.constant 0 : i32
    %c0_i32_0 = arith.constant 0 : i32
    %c0_i32_1 = arith.constant 0 : i32
    return %c0_i32, %c0_i32_0 : i32, i32
  }
  func.func @transform_3(%arg0: i32) -> (i32, i32) {
    %c0_i32 = arith.constant 0 : i32
    %c0_i32_0 = arith.constant 0 : i32
    %c0_i32_1 = arith.constant 0 : i32
    return %c0_i32, %c0_i32_0 : i32, i32
  }
  func.func @transform_4(%arg0: i32) -> i32 {
    %c0_i32 = arith.constant 0 : i32
    %c0_i32_0 = arith.constant 0 : i32
    return %c0_i32 : i32
  }
  func.func @transform_5(%arg0: i32) -> (i32, i32) {
    %c0_i32 = arith.constant 0 : i32
    %c0_i32_0 = arith.constant 0 : i32
    return %c0_i32, %arg0 : i32, i32
  }
}

</mosaic_0001>

<llo_original>
// kernel: tpu_custom_call.1
$region0: #{tpu_custom_call.1}
  #allocation0 [shape = 'u32[]', space=smem, size = 0x4, offset = 0x4, fixed_abs, tag = 'smem constant byte address 0x4 - core index']
  #allocation1 [shape = 'u32[72,128]{1,0:T(1,128)}', space=vmem, size = 0x9000, scoped, tag = 'internal scratch']
  #allocation2 [shape = 'f32[1]{0:T(128)S(6)}', space=smem, size = 0x200, scoped, tag = 'scoped memory for tpu_custom_call.1']
  %s0 = inlined_call_operand.vmem [shape: f32[500,8], index: 0, kind: input, shape index: {}]
  %s1 = inlined_call_operand.vmem [shape: f32[15,8], index: 1, kind: input, shape index: {}]
  %s2 = inlined_call_operand.vmem [shape: f32[15,1], index: 2, kind: input, shape index: {}]
  %s3 = inlined_call_operand.vmem [shape: f32[15,1], index: 3, kind: input, shape index: {}]
  %s4 = inlined_call_operand.<no memory space> [shape: f32[1], index: 4, kind: input, shape index: {}]
  %s5 = inlined_call_operand.hbm [shape: f32[1,500], index: 5, kind: output, shape index: {}]
  %s6 = sld [smem:[#allocation0]]
  $region53: #{tpu_custom_call.1} parent=0
    _
  %s8 = ssub.s32 1, %s6
  %s9 = scalar_select 0, %s8, %s6
  %10 = sst [smem:[#allocation2]] %s4
  $region1: #{tpu_custom_call.1} parent=0
    #allocation3 [shape = 'u8[2048]{0}', space=vmem, size = 0x800, scoped, tag = 'output window, operand 0']
    #allocation4 [shape = 's32[2]{0}', space=sflag, size = 0x8, scoped, tag = 'scoped memory for tpu_custom_call.1']
    %11 = vsyncpa [#allocation4], 0
    %s12 = scalar_lea.sflag [#allocation4], 1
    %13 = vsyncpa %s12, 0
    loop: start=0, step=1, limit=4
    $region2: #{tpu_custom_call.1} parent=1 // loop_pre_header
      _
    $region3: #{tpu_custom_call.1} parent=1 // loop_header
      %s15 = sphi 0, %s19
      %p16 = scmp.ge.s32.totalorder %s15, 4
      %s25 = sphi 0, %s27
      %s28 = sphi 0, %s25
      %s29 = sphi 0, %s28
      %s45 = sphi 0, %s29
      %s49 = sphi 0, %s49
      %s51 = sphi 0, %s49
      %s52 = sphi 0, %s51
      %s66 = sphi 0, %s52
      %s70 = sphi 0, %s70
      %s72 = sphi 0, %s70
      %s73 = sphi 0, %s72
      %s87 = sphi 0, %s73
      %s91 = sphi 0, %s91
      %s93 = sphi 0, %s91
      %s94 = sphi 0, %s93
      %s108 = sphi 0, %s94
      %s112 = sphi 0, %s112
      %s114 = sphi 0, %s112
      %s115 = sphi 0, %s114
      %s129 = sphi 0, %s115
      %s135 = sphi 0, %s137
      %s138 = sphi 0, %s135
      %s139 = sphi 0, %s138
      %s155 = sphi 0, %s139
    $region4: #{tpu_custom_call.1} parent=1 // loop_header_branch
      %18 = sbr.rel (%p16) target = $region8
    $region5: #{tpu_custom_call.1} parent=1 // loop_body
      %s20 = ssub.s32 %s15, 1
      %s21 = ssub.s32 %s15, 2
      %s22 = sadd.s32 %s15, 1
      %s23 = ssub.s32 %s15, %s22
      %p24 = scmp.eq.s32.totalorder %s23, 0
      %s26 = sadd.s32 %s25, 1
      %s27 = scalar_select %p24, %s25, %s26
      %p30 = pneg %p24
      %p31 = scmp.eq.s32.totalorder %s15, 1
      %p32 = por %p30, %p31
      %p33 = scmp.ne.s32.totalorder %s25, %s28
      %p34 = scmp.eq.s32.totalorder %s15, 0
      %p35 = por %p33, %p34
      %p36 = scmp.ne.s32.totalorder %s25, %s28
      %p37 = scmp.eq.s32.totalorder %s20, 1
      %p38 = por %p36, %p37
      %p39 = scmp.ne.s32.totalorder %s28, %s29
      %p40 = scmp.eq.s32.totalorder %s20, 0
      %p41 = por %p39, %p40
      %p42 = scmp.ne.s32.totalorder %s28, %s29
      %p43 = scmp.eq.s32.totalorder %s21, 1
      %p44 = por %p42, %p43
      %p46 = scmp.ne.s32.totalorder %s29, %s45
      %p47 = scmp.eq.s32.totalorder %s21, 0
      %p48 = por %p46, %p47
      %s50 = sadd.s32 %s49, 1
      %p53 = scmp.eq.s32.totalorder %s15, 1
      %p54 = scmp.ne.s32.totalorder %s49, %s51
      %p55 = scmp.eq.s32.totalorder %s15, 0
      %p56 = por %p54, %p55
      %p57 = scmp.ne.s32.totalorder %s49, %s51
      %p58 = scmp.eq.s32.totalorder %s20, 1
      %p59 = por %p57, %p58
      %p60 = scmp.ne.s32.totalorder %s51, %s52
      %p61 = scmp.eq.s32.totalorder %s20, 0
      %p62 = por %p60, %p61
      %p63 = scmp.ne.s32.totalorder %s51, %s52
      %p64 = scmp.eq.s32.totalorder %s21, 1
      %p65 = por %p63, %p64
      %p67 = scmp.ne.s32.totalorder %s52, %s66
      %p68 = scmp.eq.s32.totalorder %s21, 0
      %p69 = por %p67, %p68
      %s71 = sadd.s32 %s70, 1
      %p74 = scmp.eq.s32.totalorder %s15, 1
      %p75 = scmp.ne.s32.totalorder %s70, %s72
      %p76 = scmp.eq.s32.totalorder %s15, 0
      %p77 = por %p75, %p76
      %p78 = scmp.ne.s32.totalorder %s70, %s72
      %p79 = scmp.eq.s32.totalorder %s20, 1
      %p80 = por %p78, %p79
      %p81 = scmp.ne.s32.totalorder %s72, %s73
      %p82 = scmp.eq.s32.totalorder %s20, 0
      %p83 = por %p81, %p82
      %p84 = scmp.ne.s32.totalorder %s72, %s73
      %p85 = scmp.eq.s32.totalorder %s21, 1
      %p86 = por %p84, %p85
      %p88 = scmp.ne.s32.totalorder %s73, %s87
      %p89 = scmp.eq.s32.totalorder %s21, 0
      %p90 = por %p88, %p89
      %s92 = sadd.s32 %s91, 1
      %p95 = scmp.eq.s32.totalorder %s15, 1
      %p96 = scmp.ne.s32.totalorder %s91, %s93
      %p97 = scmp.eq.s32.totalorder %s15, 0
      %p98 = por %p96, %p97
      %p99 = scmp.ne.s32.totalorder %s91, %s93
      %p100 = scmp.eq.s32.totalorder %s20, 1
      %p101 = por %p99, %p100
      %p102 = scmp.ne.s32.totalorder %s93, %s94
      %p103 = scmp.eq.s32.totalorder %s20, 0
      %p104 = por %p102, %p103
      %p105 = scmp.ne.s32.totalorder %s93, %s94
      %p106 = scmp.eq.s32.totalorder %s21, 1
      %p107 = por %p105, %p106
      %p109 = scmp.ne.s32.totalorder %s94, %s108
      %p110 = scmp.eq.s32.totalorder %s21, 0
      %p111 = por %p109, %p110
      %s113 = sadd.s32 %s112, 1
      %p116 = scmp.eq.s32.totalorder %s15, 1
      %p117 = scmp.ne.s32.totalorder %s112, %s114
      %p118 = scmp.eq.s32.totalorder %s15, 0
      %p119 = por %p117, %p118
      %p120 = scmp.ne.s32.totalorder %s112, %s114
      %p121 = scmp.eq.s32.totalorder %s20, 1
      %p122 = por %p120, %p121
      %p123 = scmp.ne.s32.totalorder %s114, %s115
      %p124 = scmp.eq.s32.totalorder %s20, 0
      %p125 = por %p123, %p124
      %p126 = scmp.ne.s32.totalorder %s114, %s115
      %p127 = scmp.eq.s32.totalorder %s21, 1
      %p128 = por %p126, %p127
      %p130 = scmp.ne.s32.totalorder %s115, %s129
      %p131 = scmp.eq.s32.totalorder %s21, 0
      %p132 = por %p130, %p131
      %s133 = ssub.s32 %s15, %s22
      %p134 = scmp.eq.s32.totalorder %s133, 0
      %s136 = sadd.s32 %s135, 1
      %s137 = scalar_select %p134, %s135, %s136
      %p140 = pneg %p134
      %p141 = scmp.eq.s32.totalorder %s15, 1
      %p142 = por %p140, %p141
      %p143 = scmp.ne.s32.totalorder %s135, %s138
      %p144 = scmp.eq.s32.totalorder %s15, 0
      %p145 = por %p143, %p144
      %p146 = scmp.ne.s32.totalorder %s135, %s138
      %p147 = scmp.eq.s32.totalorder %s20, 1
      %p148 = por %p146, %p147
      %p149 = scmp.ne.s32.totalorder %s138, %s139
      %p150 = scmp.eq.s32.totalorder %s20, 0
      %p151 = por %p149, %p150
      %p152 = scmp.ne.s32.totalorder %s138, %s139
      %p153 = scmp.eq.s32.totalorder %s21, 1
      %p154 = por %p152, %p153
      %p156 = scmp.ne.s32.totalorder %s139, %s155
      %p157 = scmp.eq.s32.totalorder %s21, 0
      %p158 = por %p156, %p157
      %p159 = scmp.le.s32.totalorder 1, %s15
      %p160 = scmp.lt.s32.totalorder %s15, 3
      %p161 = pnand %p159, %p160
      %p162 = pneg %p161
      // Predicated region
      $region9: #{tpu_custom_call.1} parent=5 // pred_check
        _
      $region10: #{tpu_custom_call.1} parent=5 // pred_check_branch
        %164 = sbr.rel (%p161) target = $region12
      $region11: #{tpu_custom_call.1} parent=5 // pred_region
        %s165 = ssub.s32 %s15, 1
        // Predicated region
        $region13: #{tpu_custom_call.1} parent=11 // pred_check
          %p166 = pneg %p62
        $region14: #{tpu_custom_call.1} parent=11 // pred_check_branch
          %168 = sbr.rel (%p166) target = $region16
        $region15: #{tpu_custom_call.1} parent=11 // pred_region
          _
        $region16: #{tpu_custom_call.1} parent=11 // pred_fallthru
          _
        // Predicated region
        $region17: #{tpu_custom_call.1} parent=11 // pred_check
          %p169 = pneg %p83
        $region18: #{tpu_custom_call.1} parent=11 // pred_check_branch
          %171 = sbr.rel (%p169) target = $region20
        $region19: #{tpu_custom_call.1} parent=11 // pred_region
          _
        $region20: #{tpu_custom_call.1} parent=11 // pred_fallthru
          _
        // Predicated region
        $region21: #{tpu_custom_call.1} parent=11 // pred_check
          %p172 = pneg %p104
        $region22: #{tpu_custom_call.1} parent=11 // pred_check_branch
          %174 = sbr.rel (%p172) target = $region24
        $region23: #{tpu_custom_call.1} parent=11 // pred_region
          _
        $region24: #{tpu_custom_call.1} parent=11 // pred_fallthru
          _
        // Predicated region
        $region25: #{tpu_custom_call.1} parent=11 // pred_check
          %p175 = pneg %p125
        $region26: #{tpu_custom_call.1} parent=11 // pred_check_branch
          %177 = sbr.rel (%p175) target = $region28
        $region27: #{tpu_custom_call.1} parent=11 // pred_region
          _
        $region28: #{tpu_custom_call.1} parent=11 // pred_fallthru
          _
      $region12: #{tpu_custom_call.1} parent=5 // pred_fallthru
        _
      %p178 = scmp.lt.s32.totalorder %s15, 2
      // Predicated region
      $region29: #{tpu_custom_call.1} parent=5 // pred_check
        %p179 = pneg %p178
      $region30: #{tpu_custom_call.1} parent=5 // pred_check_branch
        %181 = sbr.rel (%p179) target = $region32
      $region31: #{tpu_custom_call.1} parent=5 // pred_region
        // Predicated region
        $region33: #{tpu_custom_call.1} parent=31 // pred_check
          %p182 = pneg %p35
        $region34: #{tpu_custom_call.1} parent=31 // pred_check_branch
          %184 = sbr.rel (%p182) target = $region36
        $region35: #{tpu_custom_call.1} parent=31 // pred_region
          %s185 = smul.u32 32, %s15
          %s186 = ssub.s32 63, %s185
          %p187 = scmp.lt.s32.totalorder %s186, 32
          %s188 = scalar_select %p187, %s186, 32
          %s189 = smul.u32 8, %s188
          %p190 = scmp.lt.s32.totalorder %s185, 62
          %s191 = scalar_select %p190, %s185, 62
          %s192 = smul.addr %s191, 8
          %s193 = scalar_lea.vmem %s0, %s192
          %s194 = smul.u32 32, %s15
          %s195 = ssub.s32 63, %s194
          %p196 = scmp.lt.s32.totalorder %s195, 32
          %s197 = scalar_select %p196, %s195, 32
          %s198 = smul.u32 8, %s197
        $region36: #{tpu_custom_call.1} parent=31 // pred_fallthru
          _
      $region32: #{tpu_custom_call.1} parent=5 // pred_fallthru
        _
      %p199 = scmp.le.s32.totalorder 1, %s15
      %p200 = scmp.lt.s32.totalorder %s15, 3
      %p201 = pnand %p199, %p200
      %p202 = pneg %p201
      // Predicated region
      $region37: #{tpu_custom_call.1} parent=5 // pred_check
        _
      $region38: #{tpu_custom_call.1} parent=5 // pred_check_branch
        %204 = sbr.rel (%p201) target = $region40
      $region39: #{tpu_custom_call.1} parent=5 // pred_region
        %s205 = ssub.s32 %s15, 1
        %s206 = smul.u32 32, %s20
        %s207 = ssub.s32 63, %s206
        %p208 = scmp.lt.s32.totalorder %s207, 32
        %s209 = scalar_select %p208, %s207, 32
        %s210 = smul.u32 8, %s209
        %p211 = scmp.lt.s32.totalorder %s206, 62
        %s212 = scalar_select %p211, %s206, 62
        %s213 = smul.addr %s212, 8
        %s214 = scalar_lea.vmem %s0, %s213
        %p215 = pneg %p41
        %p216 = pneg %p38
        %p217 = pneg %p62
        %p218 = pneg %p59
        %p219 = pneg %p83
        %p220 = pneg %p80
        %p221 = pneg %p104
        %p222 = pneg %p101
        %p223 = pneg %p125
        %p224 = pneg %p122
        %p225 = pneg %p151
        %p226 = pneg %p148
        %s227 = sand.u32 %s138, 1
        %s228 = scalar_lea.sflag [#allocation4], %s227
        %s229 = sand.u32 %s138, 1
        %s230 = smul.addr %s229, 2
        %s231 = scalar_lea.vmem [#allocation3], %s230
        %s232 = smul.u32 32, %s20
        %s233 = ssub.s32 63, %s232
        %p234 = scmp.lt.s32.totalorder %s233, 32
        %s235 = scalar_select %p234, %s233, 32
        %s236 = smul.u32 8, %s235
        %p237 = scmp.lt.s32.totalorder %s232, 62
        %s238 = scalar_select %p237, %s232, 62
        %s239 = smul.addr %s238, 8
        %s240 = scalar_lea.vmem %s0, %s239
        %s241 = smul.u32 32, %s20
        %s242 = ssub.s32 63, %s241
        %p243 = scmp.lt.s32.totalorder %s242, 32
        %s244 = scalar_select %p243, %s242, 32
        %s245 = smul.u32 8, %s244
        %s246 = smul.u32 2, %s20
        %v247 = vld [vmem:[%s1] sm:$0xff]
        %v248 = vld [vmem:[%s1 + $0x8] sm:$0x7f]
        %v249 = vld [vmem:[%s240] sm:$0xff]
        %v250 = vld [vmem:[%s240 + $0x8] sm:$0xff]
        %v251 = vld [vmem:[%s240 + $0x10] sm:$0xff]
        %v252 = vld [vmem:[%s240 + $0x18] sm:$0xff]
        %v253 = vld [vmem:[%s240 + $0x20] sm:$0xff]
        %v254 = vld [vmem:[%s240 + $0x28] sm:$0xff]
        %v255 = vld [vmem:[%s240 + $0x30] sm:$0xff]
        %v256 = vld [vmem:[%s240 + $0x38] sm:$0xff]
        %v257 = vld [vmem:[%s240 + $0x40] sm:$0xff]
        %v258 = vld [vmem:[%s240 + $0x48] sm:$0xff]
        %v259 = vld [vmem:[%s240 + $0x50] sm:$0xff]
        %v260 = vld [vmem:[%s240 + $0x58] sm:$0xff]
        %v261 = vld [vmem:[%s240 + $0x60] sm:$0xff]
        %v262 = vld [vmem:[%s240 + $0x68] sm:$0xff]
        %v263 = vld [vmem:[%s240 + $0x70] sm:$0xff]
        %v264 = vld [vmem:[%s240 + $0x78] sm:$0xff]
        %v265 = vld [vmem:[%s240 + $0x80] sm:$0xff]
        %v266 = vld [vmem:[%s240 + $0x88] sm:$0xff]
        %v267 = vld [vmem:[%s240 + $0x90] sm:$0xff]
        %v268 = vld [vmem:[%s240 + $0x98] sm:$0xff]
        %v269 = vld [vmem:[%s240 + $0xa0] sm:$0xff]
        %v270 = vld [vmem:[%s240 + $0xa8] sm:$0xff]
        %v271 = vld [vmem:[%s240 + $0xb0] sm:$0xff]
        %v272 = vld [vmem:[%s240 + $0xb8] sm:$0xff]
        %v273 = vld [vmem:[%s240 + $0xc0] sm:$0xff]
        %v274 = vld [vmem:[%s240 + $0xc8] sm:$0xff]
        %v275 = vld [vmem:[%s240 + $0xd0] sm:$0xff]
        %v276 = vld [vmem:[%s240 + $0xd8] sm:$0xff]
        %v277 = vld [vmem:[%s240 + $0xe0] sm:$0xff]
        %v278 = vld [vmem:[%s240 + $0xe8] sm:$0xff]
        %v279 = vld [vmem:[%s240 + $0xf0] sm:$0xff]
        %v280 = vld [vmem:[%s240 + $0xf8] sm:$0xff]
        %v281 = vld [vmem:[%s2] sm:$0xff]
        %v282 = vld [vmem:[%s2 + $0x8] sm:$0x7f]
        %284 = vset.pattern.permute.xlu0 0
        %285 = vperm.xlu0 %284, %v281
        %v286 = vpop.permute.xlu0 %285
        %289 = vset.pattern.permute.xlu0 0
        %290 = vperm.xlu0 %289, %v282
        %v291 = vpop.permute.xlu0 %290
        %vm293 = vcmask 64512
        %v295 = vsel %vm293, %v247, 0
        %v298 = vsel %vm293, %v248, 0
        %v301 = vsel %vm293, %v249, 0
        %v304 = vsel %vm293, %v250, 0
        %v307 = vsel %vm293, %v251, 0
        %v310 = vsel %vm293, %v252, 0
        %v313 = vsel %vm293, %v253, 0
        %v316 = vsel %vm293, %v254, 0
        %v319 = vsel %vm293, %v255, 0
        %v322 = vsel %vm293, %v256, 0
        %v325 = vsel %vm293, %v257, 0
        %v328 = vsel %vm293, %v258, 0
        %v331 = vsel %vm293, %v259, 0
        %v334 = vsel %vm293, %v260, 0
        %v337 = vsel %vm293, %v261, 0
        %v340 = vsel %vm293, %v262, 0
        %v343 = vsel %vm293, %v263, 0
        %v346 = vsel %vm293, %v264, 0
        %v349 = vsel %vm293, %v265, 0
        %v352 = vsel %vm293, %v266, 0
        %v355 = vsel %vm293, %v267, 0
        %v358 = vsel %vm293, %v268, 0
        %v361 = vsel %vm293, %v269, 0
        %v364 = vsel %vm293, %v270, 0
        %v367 = vsel %vm293, %v271, 0
        %v370 = vsel %vm293, %v272, 0
        %v373 = vsel %vm293, %v273, 0
        %v376 = vsel %vm293, %v274, 0
        %v379 = vsel %vm293, %v275, 0
        %v382 = vsel %vm293, %v276, 0
        %v385 = vsel %vm293, %v277, 0
        %v388 = vsel %vm293, %v278, 0
        %v391 = vsel %vm293, %v279, 0
        %v394 = vsel %vm293, %v280, 0
        %396 = vmatpush.xpose.msra.mxu0 %v346
        %397 = vmatpush.xpose.msra.mxu0 %v343
        %398 = vmatpush.xpose.msra.mxu0 %v340
        %399 = vmatpush.xpose.msra.mxu0 %v337
        %400 = vmatpush.xpose.msra.mxu0 %v334
        %401 = vmatpush.xpose.msra.mxu0 %v331
        %402 = vmatpush.xpose.msra.mxu0 %v328
        %403 = vmatpush.xpose.msra.mxu0 %v325
        %404 = vmatpush.xpose.msra.mxu0 %v322
        %405 = vmatpush.xpose.msra.mxu0 %v319
        %406 = vmatpush.xpose.msra.mxu0 %v316
        %407 = vmatpush.xpose.msra.mxu0 %v313
        %408 = vmatpush.xpose.msra.mxu0 %v310
        %409 = vmatpush.xpose.msra.mxu0 %v307
        %410 = vmatpush.xpose.msra.mxu0 %v304
        %411 = vmatpush.xpose.msra.mxu0 %v301
        %412 = vmatmul.f32.gmra.mxu0 %v295
        %v413 = vpop.f32.mrf.mxu0
        %v414 = vadd.f32 %v286, %v413
        %415 = vmatmul.f32.gmra.mxu0 %v298
        %v416 = vpop.f32.mrf.mxu0
        %v417 = vadd.f32 %v291, %v416
        %418 = vdwg.mxu0
        %419 = vmatpush.xpose.msra.mxu0 %v394
        %420 = vmatpush.xpose.msra.mxu0 %v391
        %421 = vmatpush.xpose.msra.mxu0 %v388
        %422 = vmatpush.xpose.msra.mxu0 %v385
        %423 = vmatpush.xpose.msra.mxu0 %v382
        %424 = vmatpush.xpose.msra.mxu0 %v379
        %425 = vmatpush.xpose.msra.mxu0 %v376
        %426 = vmatpush.xpose.msra.mxu0 %v373
        %427 = vmatpush.xpose.msra.mxu0 %v370
        %428 = vmatpush.xpose.msra.mxu0 %v367
        %429 = vmatpush.xpose.msra.mxu0 %v364
        %430 = vmatpush.xpose.msra.mxu0 %v361
        %431 = vmatpush.xpose.msra.mxu0 %v358
        %432 = vmatpush.xpose.msra.mxu0 %v355
        %433 = vmatpush.xpose.msra.mxu0 %v352
        %434 = vmatpush.xpose.msra.mxu0 %v349
        %435 = vmatmul.f32.gmra.mxu0 %v295
        %v436 = vpop.f32.mrf.mxu0
        %v437 = vadd.f32 %v286, %v436
        %438 = vmatmul.f32.gmra.mxu0 %v298
        %v439 = vpop.f32.mrf.mxu0
        %v440 = vadd.f32 %v291, %v439
        %441 = vdwg.mxu0
        %vm442 = vcmp.gt.f32.partialorder %v414, 0.0
        %vm443 = vcmp.gt.f32.partialorder %v437, 0.0
        %vm444 = vcmp.gt.f32.partialorder %v417, 0.0
        %vm445 = vcmp.gt.f32.partialorder %v440, 0.0
        %v446 = vmul.f32 %v414, 0.01
        %v447 = vmul.f32 %v437, 0.01
        %v448 = vmul.f32 %v417, 0.01
        %v449 = vmul.f32 %v440, 0.01
        %v450 = vsel %vm442, %v414, %v446
        %v451 = vsel %vm443, %v437, %v447
        %v452 = vsel %vm444, %v417, %v448
        %v453 = vsel %vm445, %v440, %v449
        %v454 = vld [vmem:[%s3] sm:$0xff]
        %v455 = vld [vmem:[%s3 + $0x8] sm:$0x7f]
        %457 = vset.pattern.permute.xlu0 0
        %458 = vperm.xlu0 %457, %v454
        %v459 = vpop.permute.xlu0 %458
        %462 = vset.pattern.permute.xlu0 0
        %463 = vperm.xlu0 %462, %v455
        %v464 = vpop.permute.xlu0 %463
        %v466 = vmul.f32 %v450, %v459
        %v467 = vmul.f32 %v451, %v459
        %v468 = vmul.f32 %v452, %v464
        %v469 = vmul.f32 %v453, %v464
        %vm470 = vcmask 1046528
        %v471 = vsel %vm470, %v468, 0.0
        %v472 = vadd.f32 %v466, %v471
        %v473 = vrot.slane %v472, 4
        %v474 = vadd.f32 %v472, %v473
        %v475 = vrot.slane %v474, 2
        %v476 = vadd.f32 %v474, %v475
        %v477 = vrot.slane %v476, 1
        %v478 = vadd.f32 %v476, %v477
        %v479 = vsel %vm470, %v469, 0.0
        %v480 = vadd.f32 %v467, %v479
        %v481 = vrot.slane %v480, 4
        %v482 = vadd.f32 %v480, %v481
        %v483 = vrot.slane %v482, 2
        %v484 = vadd.f32 %v482, %v483
        %v485 = vrot.slane %v484, 1
        %v486 = vadd.f32 %v484, %v485
        %s487 = sld [smem:[#allocation2]]
        %v488 = vstv %s487
        %v489 = vadd.f32 %v478, %v488
        %v490 = vadd.f32 %v486, %v488
        %v493 = vrot.slane %v490, 7
        %vm494 = vcmask 1040384
        %v495 = vsel %vm494, %v489, %v493
        %v497 = vlaneseq
        %vm498 = vcmp.ge.s32.totalorder %v497, 0
        %vm499 = vcmp.lt.s32.totalorder %v497, 256
        %vm500 = vmand %vm498, %vm499
        %501 = vst.msk [vmem:[%s231] sm:$0x3] %vm500, %v495
        %s502 = sand.u32 %s138, 1
        %s503 = scalar_lea.sflag [#allocation4], %s502
        %s504 = sand.u32 %s138, 1
        %s505 = smul.addr %s504, 2
        %s506 = scalar_lea.vmem [#allocation3], %s505
        // Predicated region
        $region41: #{tpu_custom_call.1} parent=39 // pred_check
          %p507 = pneg %p148
        $region42: #{tpu_custom_call.1} parent=39 // pred_check_branch
          %509 = sbr.rel (%p507) target = $region44
        $region43: #{tpu_custom_call.1} parent=39 // pred_region
          %s510 = smul.u32 2, %s20
          %512 = vsyncadd %s503, 0
          %s513 = scalar_lea.hbm %s5, %s510
          %s515 = sshll.u32 %s506, 4
          %s516 = int_to_ptr.vmem [resolvable:$true] %s515
          %s517 = sshll.u32 %s513, 4
          %s518 = int_to_ptr.hbm [resolvable:$true] %s517
          %520 = dma.vmem_to_hbm [thread:$0]  %s516, 32, %s518, %s503
        $region44: #{tpu_custom_call.1} parent=39 // pred_fallthru
          _
      $region40: #{tpu_custom_call.1} parent=5 // pred_fallthru
        _
      %p521 = scmp.le.s32.totalorder 2, %s15
      // Predicated region
      $region45: #{tpu_custom_call.1} parent=5 // pred_check
        %p522 = pneg %p521
      $region46: #{tpu_custom_call.1} parent=5 // pred_check_branch
        %524 = sbr.rel (%p522) target = $region48
      $region47: #{tpu_custom_call.1} parent=5 // pred_region
        %s525 = ssub.s32 %s15, 2
        // Predicated region
        $region49: #{tpu_custom_call.1} parent=47 // pred_check
          %p526 = pneg %p154
        $region50: #{tpu_custom_call.1} parent=47 // pred_check_branch
          %528 = sbr.rel (%p526) target = $region52
        $region51: #{tpu_custom_call.1} parent=47 // pred_region
          %s529 = sand.u32 %s139, 1
          %s530 = scalar_lea.sflag [#allocation4], %s529
          %s531 = sand.u32 %s139, 1
          %s532 = smul.addr %s531, 2
          %s533 = scalar_lea.vmem [#allocation3], %s532
          %535 = dma.done %s530, 32
        $region52: #{tpu_custom_call.1} parent=47 // pred_fallthru
          _
      $region48: #{tpu_custom_call.1} parent=5 // pred_fallthru
        _
    $region6: #{tpu_custom_call.1} parent=1 // loop_footer
      %s19 = sadd.s32 1, %s15
    $region7: #{tpu_custom_call.1} parent=1 // loop_footer_branch
      %14 = sbr.rel target = $region3
    $region8: #{tpu_custom_call.1} parent=1 // loop_exit
      _
    %536 = vsyncpa [#allocation4], 1
    %s537 = scalar_lea.sflag [#allocation4], 1
    %538 = vsyncpa %s537, 1

</llo_original>
